<compile_context>
chip_gen: v6e
topology: v6e:2x2x1
jax: 0.10.0
libtpu: 0.0.40
codegen_flags: <defaults>
</compile_context>

<pallas_src>
import functools

import jax
import jax.numpy as jnp
from jax import lax
from jax.experimental import pallas as pl
from jax.experimental.pallas import tpu as pltpu

BN_EPS = 1e-5
LANE = 128
SUBLANE = 8


def _round_up(x, m):
    return (x + m - 1) // m * m


def softmax_branch_kernel(x_ref, wc_ref, bc_ref, gamma_ref, beta_ref,
                          wl_ref, bl_ref, logits_ref, emb_ref, xr_ref,
                          *, n_real):
    """One grid step produces one (N_p, tn) tile of the logits.

    Tile 0 additionally computes the 1x1-conv embedding, batch-norm (training
    mode, statistics over the real rows only) and ReLU, caching the normalized
    activations (bf16) in VMEM scratch for the remaining tiles.
    """
    j = pl.program_id(0)

    @pl.when(j == 0)
    def _():
        # conv_1x1 on a 1x1 map == dense: emb = x @ Wc^T + bc  (MXU, bf16 in / f32 acc)
        emb = jnp.dot(x_ref[...], wc_ref[...],
                      preferred_element_type=jnp.float32) + bc_ref[...]
        emb_ref[...] = emb                               # pre-BN embedding output

        # BatchNorm1d, training mode: batch mean / biased variance over the
        # real N rows only (padded rows would otherwise contribute the bias).
        row_ids = lax.broadcasted_iota(jnp.int32, emb.shape, 0)
        mask = (row_ids < n_real).astype(jnp.float32)
        inv_n = jnp.float32(1.0 / n_real)
        mean = jnp.sum(emb * mask, axis=0, keepdims=True) * inv_n
        centered = (emb - mean) * mask
        var = jnp.sum(centered * centered, axis=0, keepdims=True) * inv_n

        # Fold gamma*rsqrt and beta-mean into a single per-channel scale+shift.
        s = gamma_ref[...] * lax.rsqrt(var + BN_EPS)
        t = beta_ref[...] - mean * s
        xr = jnp.maximum(emb * s + t, 0.0)               # ReLU
        xr_ref[...] = xr.astype(jnp.bfloat16)

    # Classifier tile j: logits[:, j*tn:(j+1)*tn]  (MXU, bf16 in / f32 acc)
    logits_ref[...] = (jnp.dot(xr_ref[...], wl_ref[...],
                               preferred_element_type=jnp.float32)
                       + bl_ref[...])


def prepare_params(conv_w, conv_b, bn_gamma, bn_beta, lin_w, lin_b):
    """One-time weight prep: transpose, pad to lane-dense (multiple-of-128)
    shapes, cast matmul operands to bf16. Run this outside the hot path so the
    per-call cost is only the kernel itself."""
    dim, c_in = conv_w.shape[0], conv_w.shape[1]
    num_classes = lin_w.shape[0]

    c_in_p = _round_up(max(c_in, LANE), LANE)
    dim_p = _round_up(max(dim, LANE), LANE)
    # Classifier tile width: lane-dense, capped at 512 so the per-tile VMEM
    # footprint (2x wl buffers + 2x logits buffers + scratch) stays far under
    # v7x's 64 MiB per-core budget even at C_in~2048, dim~512.
    tn = 512 if num_classes > 512 else _round_up(max(num_classes, LANE), LANE)
    nc_p = _round_up(max(num_classes, tn), tn)

    wc_t = jnp.zeros((c_in_p, dim_p), jnp.bfloat16).at[:c_in, :dim].set(
        conv_w.reshape(dim, c_in).T.astype(jnp.bfloat16))
    bc = jnp.zeros((1, dim_p), jnp.float32).at[:, :dim].set(
        conv_b.reshape(1, dim).astype(jnp.float32))
    gamma = jnp.zeros((1, dim_p), jnp.float32).at[:, :dim].set(
        bn_gamma.reshape(1, dim).astype(jnp.float32))
    beta = jnp.zeros((1, dim_p), jnp.float32).at[:, :dim].set(
        bn_beta.reshape(1, dim).astype(jnp.float32))
    wl_t = jnp.zeros((dim_p, nc_p), jnp.bfloat16).at[:dim, :num_classes].set(
        lin_w.T.astype(jnp.bfloat16))
    bl = jnp.zeros((1, nc_p), jnp.float32).at[:, :num_classes].set(
        lin_b.reshape(1, num_classes).astype(jnp.float32))

    meta = dict(c_in=c_in, dim=dim, num_classes=num_classes,
                c_in_p=c_in_p, dim_p=dim_p, nc_p=nc_p, tn=tn)
    return (wc_t, bc, gamma, beta, wl_t, bl), meta


def softmax_branch(x_nchw, params, meta):
    """Forward pass of SoftmaxBranch. Returns (logits, emb)."""
    N, c_in, H, W = x_nchw.shape
    assert H == 1 and W == 1, "BatchNorm1d(dim) after flatten requires H=W=1"
    assert c_in == meta["c_in"]
    wc_t, bc, gamma, beta, wl_t, bl = params
    c_in_p = meta["c_in_p"]
    dim_p = meta["dim_p"]
    nc_p = meta["nc_p"]
    tn = meta["tn"]
    dim = meta["dim"]
    num_classes = meta["num_classes"]

    n_p = _round_up(max(N, SUBLANE), SUBLANE)
    x2d = jnp.zeros((n_p, c_in_p), jnp.bfloat16).at[:N, :c_in].set(
        x_nchw.reshape(N, c_in).astype(jnp.bfloat16))

    grid = (nc_p // tn,)
    kernel = functools.partial(softmax_branch_kernel, n_real=N)

    flops = 2 * n_p * (c_in_p * dim_p + dim_p * nc_p)
    bytes_accessed = (x2d.size * 2 + wc_t.size * 2 + wl_t.size * 2
                      + (bc.size + gamma.size + beta.size + bl.size) * 4
                      + n_p * nc_p * 4 + n_p * dim_p * 4)

    logits_p, emb_p = pl.pallas_call(
        kernel,
        grid_spec=pltpu.PrefetchScalarGridSpec(
            num_scalar_prefetch=0,
            grid=grid,
            in_specs=[
                pl.BlockSpec((n_p, c_in_p), lambda j: (0, 0)),    # x
                pl.BlockSpec((c_in_p, dim_p), lambda j: (0, 0)),  # conv weight^T
                pl.BlockSpec((1, dim_p), lambda j: (0, 0)),       # conv bias
                pl.BlockSpec((1, dim_p), lambda j: (0, 0)),       # bn gamma
                pl.BlockSpec((1, dim_p), lambda j: (0, 0)),       # bn beta
                pl.BlockSpec((dim_p, tn), lambda j: (0, j)),      # linear weight^T tile
                pl.BlockSpec((1, tn), lambda j: (0, j)),          # linear bias tile
            ],
            out_specs=(
                pl.BlockSpec((n_p, tn), lambda j: (0, j)),        # logits tile
                pl.BlockSpec((n_p, dim_p), lambda j: (0, 0)),     # emb (written at j==0)
            ),
            scratch_shapes=[pltpu.VMEM((n_p, dim_p), jnp.bfloat16)],  # relu(bn(emb))
        ),
        out_shape=(jax.ShapeDtypeStruct((n_p, nc_p), jnp.float32),
                   jax.ShapeDtypeStruct((n_p, dim_p), jnp.float32)),
        compiler_params=pltpu.CompilerParams(
            # The classifier axis reuses activations computed at tile 0 (held
            # in scratch) and writes the resident emb block, so it must stay
            # "arbitrary" (sequential); splitting it across v7x's two cores
            # would leave one core with an uninitialized scratch.
            dimension_semantics=("arbitrary",),
            vmem_limit_bytes=48 * 1024 * 1024,  # < 64 MiB (v7x physical), > 32 MiB default
        ),
        cost_estimate=pl.CostEstimate(flops=flops, transcendentals=0,
                                      bytes_accessed=bytes_accessed),
    )(x2d, wc_t, bc, gamma, beta, wl_t, bl)

    return logits_p[:N, :num_classes], emb_p[:N, :dim]


def softmax_branch_ref(x_nchw, conv_w, conv_b, bn_gamma, bn_beta, lin_w, lin_b):
    """Pure-JAX reference of the same algorithm (bf16 matmuls, f32 BN)."""
    N, c_in, _, _ = x_nchw.shape
    dim = conv_w.shape[0]
    x2d = x_nchw.reshape(N, c_in).astype(jnp.bfloat16)
    wc_t = conv_w.reshape(dim, c_in).T.astype(jnp.bfloat16)
    emb = (jnp.dot(x2d, wc_t, preferred_element_type=jnp.float32)
           + conv_b.astype(jnp.float32))
    mean = jnp.mean(emb, axis=0, keepdims=True)
    var = jnp.mean((emb - mean) ** 2, axis=0, keepdims=True)
    s = bn_gamma.astype(jnp.float32) * lax.rsqrt(var + BN_EPS)
    t = bn_beta.astype(jnp.float32) - mean * s
    xr = jnp.maximum(emb * s + t, 0.0)
    logits = (jnp.dot(xr.astype(jnp.bfloat16), lin_w.T.astype(jnp.bfloat16),
                      preferred_element_type=jnp.float32)
              + lin_b.astype(jnp.float32))
    return logits, emb


if __name__ == "__main__":
    # Small shapes consistent with the module: conv_1x1 = int (channel group
    # size) -> Conv2d(C_in, dim, 1); H=W=1 so BatchNorm1d(dim) is valid.
    # N=6 deliberately exercises the masked-BN path (N is padded to 8).
    N, C_in, dim, num_classes = 6, 4, 32, 16

    key = jax.random.PRNGKey(0)
    k = jax.random.split(key, 7)
    x = jax.random.normal(k[0], (N, C_in, 1, 1), jnp.float32)
    conv_w = jax.random.normal(k[1], (dim, C_in, 1, 1), jnp.float32) * 0.1
    conv_b = jax.random.normal(k[2], (dim,), jnp.float32) * 0.1
    bn_gamma = 1.0 + 0.1 * jax.random.normal(k[3], (dim,), jnp.float32)
    bn_beta = 0.1 * jax.random.normal(k[4], (dim,), jnp.float32)
    lin_w = jax.random.normal(k[5], (num_classes, dim), jnp.float32) * 0.1
    lin_b = jax.random.normal(k[6], (num_classes,), jnp.float32) * 0.1

    params, meta = prepare_params(conv_w, conv_b, bn_gamma, bn_beta, lin_w, lin_b)
    logits, emb = softmax_branch(x, params, meta)
    jax.block_until_ready((logits, emb))

    logits_ref, emb_ref = softmax_branch_ref(x, conv_w, conv_b, bn_gamma,
                                             bn_beta, lin_w, lin_b)
    assert logits.shape == (N, num_classes) and emb.shape == (N, dim)
    assert jnp.allclose(emb, emb_ref, atol=2e-3, rtol=2e-3), \
        float(jnp.max(jnp.abs(emb - emb_ref)))
    assert jnp.allclose(logits, logits_ref, atol=2e-3, rtol=2e-3), \
        float(jnp.max(jnp.abs(logits - logits_ref)))

    print("KERNEL_OK")
</pallas_src>

<mosaic_0001>
module attributes {stable_mosaic.version = 11 : i64} {
  func.func @softmax_branch_kernel(%arg0: i32, %arg1: memref<8x128xbf16, #tpu.memory_space<vmem>>, %arg2: memref<128x128xbf16, #tpu.memory_space<vmem>>, %arg3: memref<1x128xf32, #tpu.memory_space<vmem>>, %arg4: memref<1x128xf32, #tpu.memory_space<vmem>>, %arg5: memref<1x128xf32, #tpu.memory_space<vmem>>, %arg6: memref<128x128xbf16, #tpu.memory_space<vmem>>, %arg7: memref<1x128xf32, #tpu.memory_space<vmem>>, %arg8: memref<8x128xf32, #tpu.memory_space<vmem>>, %arg9: memref<8x128xf32, #tpu.memory_space<vmem>>, %arg10: memref<8x128xbf16, #tpu.memory_space<vmem>>) attributes {dimension_semantics = [#tpu.dimension_semantics<arbitrary>], iteration_bounds = array<i64: 1>, scalar_prefetch = 0 : i64, scratch_operands = 1 : i64, tpu.core_type = #tpu.core_type<tc>, window_params = [{pipeline_mode = #tpu.pipeline_mode<synchronous>, transform_indices = @transform_0, window_bounds = array<i64: 8, 128>}, {pipeline_mode = #tpu.pipeline_mode<synchronous>, transform_indices = @transform_1, window_bounds = array<i64: 128, 128>}, {pipeline_mode = #tpu.pipeline_mode<synchronous>, transform_indices = @transform_2, window_bounds = array<i64: 1, 128>}, {pipeline_mode = #tpu.pipeline_mode<synchronous>, transform_indices = @transform_3, window_bounds = array<i64: 1, 128>}, {pipeline_mode = #tpu.pipeline_mode<synchronous>, transform_indices = @transform_4, window_bounds = array<i64: 1, 128>}, {transform_indices = @transform_5, window_bounds = array<i64: 128, 128>}, {transform_indices = @transform_6, window_bounds = array<i64: 1, 128>}, {transform_indices = @transform_7, window_bounds = array<i64: 8, 128>}, {pipeline_mode = #tpu.pipeline_mode<synchronous>, transform_indices = @transform_8, window_bounds = array<i64: 8, 128>}]} {
    %c0_i32 = arith.constant 0 : i32
    %0 = arith.cmpi eq, %arg0, %c0_i32 : i32
    %1 = arith.extui %0 : i1 to i32
    %c0_i32_0 = arith.constant 0 : i32
    %2 = arith.cmpi ne, %1, %c0_i32_0 : i32
    scf.if %2 {
      %c0_8 = arith.constant 0 : index
      %c0_9 = arith.constant 0 : index
      %10 = vector.load %arg1[%c0_8, %c0_9] : memref<8x128xbf16, #tpu.memory_space<vmem>>, vector<8x128xbf16>
      %c0_10 = arith.constant 0 : index
      %c0_11 = arith.constant 0 : index
      %11 = vector.load %arg2[%c0_10, %c0_11] : memref<128x128xbf16, #tpu.memory_space<vmem>>, vector<128x128xbf16>
      %cst_12 = arith.constant dense<0.000000e+00> : vector<8x128xf32>
      %12 = tpu.matmul %10, %11, %cst_12 {dimension_numbers = #tpu.dot_dimension_numbers<[1], [0], [0], [1], [0, 0, 1, 1], [], []>} : vector<8x128xbf16>, vector<128x128xbf16>, vector<8x128xf32> -> vector<8x128xf32>
      %c0_13 = arith.constant 0 : index
      %c0_14 = arith.constant 0 : index
      %13 = vector.load %arg3[%c0_13, %c0_14] : memref<1x128xf32, #tpu.memory_space<vmem>>, vector<1x128xf32>
      %14 = vector.broadcast %13 : vector<1x128xf32> to vector<8x128xf32>
      %15 = arith.addf %12, %14 : vector<8x128xf32>
      %c0_15 = arith.constant 0 : index
      %c0_16 = arith.constant 0 : index
      %16 = vector.load %arg9[%c0_15, %c0_16] : memref<8x128xf32, #tpu.memory_space<vmem>>, vector<8x128xf32>
      tpu.vector_store %arg9[%c0_15, %c0_16], %15 {strides = array<i32>} : memref<8x128xf32, #tpu.memory_space<vmem>>, vector<8x128xf32>,
      %17 = tpu.iota {dimensions = array<i32: 0>} : vector<8x128xi32>
      %c6_i32 = arith.constant 6 : i32
      %18 = vector.broadcast %c6_i32 : i32 to vector<8x128xi32>
      %19 = arith.cmpi slt, %17, %18 : vector<8x128xi32>
      %20 = arith.extui %19 : vector<8x128xi1> to vector<8x128xi32>
      %21 = arith.sitofp %20 : vector<8x128xi32> to vector<8x128xf32>
      %22 = arith.mulf %15, %21 : vector<8x128xf32>
      %cst_17 = arith.constant dense<0.000000e+00> : vector<128xf32>
      %23 = vector.multi_reduction <add>, %22, %cst_17 [0] : vector<8x128xf32> to vector<128xf32>
      %24 = vector.shape_cast %23 : vector<128xf32> to vector<1x128xf32>
      %cst_18 = arith.constant 0.166666672 : f32
      %25 = vector.broadcast %cst_18 : f32 to vector<1x128xf32>
      %26 = arith.mulf %24, %25 : vector<1x128xf32>
      %27 = vector.broadcast %26 : vector<1x128xf32> to vector<8x128xf32>
      %28 = arith.subf %15, %27 : vector<8x128xf32>
      %29 = arith.mulf %28, %21 : vector<8x128xf32>
      %30 = arith.mulf %29, %29 : vector<8x128xf32>
      %cst_19 = arith.constant dense<0.000000e+00> : vector<128xf32>
      %31 = vector.multi_reduction <add>, %30, %cst_19 [0] : vector<8x128xf32> to vector<128xf32>
      %32 = vector.shape_cast %31 : vector<128xf32> to vector<1x128xf32>
      %cst_20 = arith.constant 0.166666672 : f32
      %33 = vector.broadcast %cst_20 : f32 to vector<1x128xf32>
      %34 = arith.mulf %32, %33 : vector<1x128xf32>
      %c0_21 = arith.constant 0 : index
      %c0_22 = arith.constant 0 : index
      %35 = vector.load %arg4[%c0_21, %c0_22] : memref<1x128xf32, #tpu.memory_space<vmem>>, vector<1x128xf32>
      %cst_23 = arith.constant 9.99999974E-6 : f32
      %36 = vector.broadcast %cst_23 : f32 to vector<1x128xf32>
      %37 = arith.addf %34, %36 : vector<1x128xf32>
      %38 = math.rsqrt %37 : vector<1x128xf32>
      %39 = arith.mulf %35, %38 : vector<1x128xf32>
      %c0_24 = arith.constant 0 : index
      %c0_25 = arith.constant 0 : index
      %40 = vector.load %arg5[%c0_24, %c0_25] : memref<1x128xf32, #tpu.memory_space<vmem>>, vector<1x128xf32>
      %41 = arith.mulf %26, %39 : vector<1x128xf32>
      %42 = arith.subf %40, %41 : vector<1x128xf32>
      %43 = vector.broadcast %39 : vector<1x128xf32> to vector<8x128xf32>
      %44 = arith.mulf %15, %43 : vector<8x128xf32>
      %45 = vector.broadcast %42 : vector<1x128xf32> to vector<8x128xf32>
      %46 = arith.addf %44, %45 : vector<8x128xf32>
      %cst_26 = arith.constant 0.000000e+00 : f32
      %47 = vector.broadcast %cst_26 : f32 to vector<8x128xf32>
      %48 = arith.maximumf %46, %47 : vector<8x128xf32>
      %49 = arith.truncf %48 : vector<8x128xf32> to vector<8x128xbf16>
      %c0_27 = arith.constant 0 : index
      %c0_28 = arith.constant 0 : index
      %50 = vector.load %arg10[%c0_27, %c0_28] : memref<8x128xbf16, #tpu.memory_space<vmem>>, vector<8x128xbf16>
      tpu.vector_store %arg10[%c0_27, %c0_28], %49 {strides = array<i32>} : memref<8x128xbf16, #tpu.memory_space<vmem>>, vector<8x128xbf16>,
    } else {
    }
    %c0 = arith.constant 0 : index
    %c0_1 = arith.constant 0 : index
    %3 = vector.load %arg10[%c0, %c0_1] : memref<8x128xbf16, #tpu.memory_space<vmem>>, vector<8x128xbf16>
    %c0_2 = arith.constant 0 : index
    %c0_3 = arith.constant 0 : index
    %4 = vector.load %arg6[%c0_2, %c0_3] : memref<128x128xbf16, #tpu.memory_space<vmem>>, vector<128x128xbf16>
    %cst = arith.constant dense<0.000000e+00> : vector<8x128xf32>
    %5 = tpu.matmul %3, %4, %cst {dimension_numbers = #tpu.dot_dimension_numbers<[1], [0], [0], [1], [0, 0, 1, 1], [], []>} : vector<8x128xbf16>, vector<128x128xbf16>, vector<8x128xf32> -> vector<8x128xf32>
    %c0_4 = arith.constant 0 : index
    %c0_5 = arith.constant 0 : index
    %6 = vector.load %arg7[%c0_4, %c0_5] : memref<1x128xf32, #tpu.memory_space<vmem>>, vector<1x128xf32>
    %7 = vector.broadcast %6 : vector<1x128xf32> to vector<8x128xf32>
    %8 = arith.addf %5, %7 : vector<8x128xf32>
    %c0_6 = arith.constant 0 : index
    %c0_7 = arith.constant 0 : index
    %9 = vector.load %arg8[%c0_6, %c0_7] : memref<8x128xf32, #tpu.memory_space<vmem>>, vector<8x128xf32>
    tpu.vector_store %arg8[%c0_6, %c0_7], %8 {strides = array<i32>} : memref<8x128xf32, #tpu.memory_space<vmem>>, vector<8x128xf32>,
    return
  }
  func.func @transform_0(%arg0: i32) -> (i32, i32) {
    %c0_i32 = arith.constant 0 : i32
    %c0_i32_0 = arith.constant 0 : i32
    %c0_i32_1 = arith.constant 0 : i32
    return %c0_i32, %c0_i32_0 : i32, i32
  }
  func.func @transform_1(%arg0: i32) -> (i32, i32) {
    %c0_i32 = arith.constant 0 : i32
    %c0_i32_0 = arith.constant 0 : i32
    %c0_i32_1 = arith.constant 0 : i32
    return %c0_i32, %c0_i32_0 : i32, i32
  }
  func.func @transform_2(%arg0: i32) -> (i32, i32) {
    %c0_i32 = arith.constant 0 : i32
    %c0_i32_0 = arith.constant 0 : i32
    %c0_i32_1 = arith.constant 0 : i32
    return %c0_i32, %c0_i32_0 : i32, i32
  }
  func.func @transform_3(%arg0: i32) -> (i32, i32) {
    %c0_i32 = arith.constant 0 : i32
    %c0_i32_0 = arith.constant 0 : i32
    %c0_i32_1 = arith.constant 0 : i32
    return %c0_i32, %c0_i32_0 : i32, i32
  }
  func.func @transform_4(%arg0: i32) -> (i32, i32) {
    %c0_i32 = arith.constant 0 : i32
    %c0_i32_0 = arith.constant 0 : i32
    %c0_i32_1 = arith.constant 0 : i32
    return %c0_i32, %c0_i32_0 : i32, i32
  }
  func.func @transform_5(%arg0: i32) -> (i32, i32) {
    %c0_i32 = arith.constant 0 : i32
    %c0_i32_0 = arith.constant 0 : i32
    return %c0_i32, %arg0 : i32, i32
  }
  func.func @transform_6(%arg0: i32) -> (i32, i32) {
    %c0_i32 = arith.constant 0 : i32
    %c0_i32_0 = arith.constant 0 : i32
    return %c0_i32, %arg0 : i32, i32
  }
  func.func @transform_7(%arg0: i32) -> (i32, i32) {
    %c0_i32 = arith.constant 0 : i32
    %c0_i32_0 = arith.constant 0 : i32
    return %c0_i32, %arg0 : i32, i32
  }
  func.func @transform_8(%arg0: i32) -> (i32, i32) {
    %c0_i32 = arith.constant 0 : i32
    %c0_i32_0 = arith.constant 0 : i32
    %c0_i32_1 = arith.constant 0 : i32
    return %c0_i32, %c0_i32_0 : i32, i32
  }
}

</mosaic_0001>

<llo_original>
// kernel: tpu_custom_call.1
$region0: #{tpu_custom_call.1}
  #allocation0 [shape = 'u32[]', space=smem, size = 0x4, offset = 0x4, fixed_abs, tag = 'smem constant byte address 0x4 - core index']
  #allocation1 [shape = 'u32[144,128]{1,0:T(1,128)}', space=vmem, size = 0x12000, scoped, tag = 'internal scratch']
  #allocation2 [shape = 'bf16[8,128]{1,0:T(8,128)(2,1)}', space=vmem, size = 0x800, scoped, tag = 'scratch operand']
  %s0 = inlined_call_operand.hbm [shape: bf16[8,128], index: 0, kind: input, shape index: {}]
  %s1 = inlined_call_operand.hbm [shape: bf16[128,128], index: 1, kind: input, shape index: {}]
  %s2 = inlined_call_operand.vmem [shape: f32[1,128], index: 2, kind: input, shape index: {}]
  %s3 = inlined_call_operand.vmem [shape: f32[1,128], index: 3, kind: input, shape index: {}]
  %s4 = inlined_call_operand.vmem [shape: f32[1,128], index: 4, kind: input, shape index: {}]
  %s5 = inlined_call_operand.hbm [shape: bf16[128,128], index: 5, kind: input, shape index: {}]
  %s6 = inlined_call_operand.vmem [shape: f32[1,128], index: 6, kind: input, shape index: {}]
  %s7 = inlined_call_operand.hbm [shape: f32[8,128], index: 7, kind: output, shape index: {0}]
  %s8 = inlined_call_operand.hbm [shape: f32[8,128], index: 8, kind: output, shape index: {1}]
  %9 = xla_tuple %s7, %s8
  %s10 = sld [smem:[#allocation0]]
  $region62: #{tpu_custom_call.1} parent=0
    _
  %s12 = ssub.s32 1, %s10
  %s13 = scalar_select 0, %s12, %s10
  $region1: #{tpu_custom_call.1} parent=0
    #allocation3 [shape = 'u8[2048]{0}', space=vmem, size = 0x800, scoped, tag = 'input window, operand 0, single buffered']
    #allocation4 [shape = 's32[1]{0}', space=sflag, size = 0x4, scoped, tag = 'scoped memory for tpu_custom_call.1']
    #allocation5 [shape = 's32[1]{0}', space=sflag, size = 0x4, scoped, tag = 'scoped memory for tpu_custom_call.1']
    #allocation6 [shape = 'u8[32768]{0}', space=vmem, size = 0x8000, scoped, tag = 'input window, operand 1, single buffered']
    #allocation7 [shape = 's32[1]{0}', space=sflag, size = 0x4, scoped, tag = 'scoped memory for tpu_custom_call.1']
    #allocation8 [shape = 'u8[32768]{0}', space=vmem, size = 0x8000, scoped, tag = 'input window, operand 5, single buffered']
    #allocation9 [shape = 'u8[4096]{0}', space=vmem, size = 0x1000, scoped, tag = 'output window, operand 0, single buffered']
    #allocation10 [shape = 'u8[4096]{0}', space=vmem, size = 0x1000, scoped, tag = 'output window, operand 1, single buffered']
    #allocation11 [shape = 's32[1]{0}', space=sflag, size = 0x4, scoped, tag = 'scoped memory for tpu_custom_call.1']
    %14 = vsyncpa [#allocation4], 0
    %15 = vsyncpa [#allocation7], 0
    %16 = vsyncpa [#allocation5], 0
    %17 = vsyncpa [#allocation11], 0
    // Predicated region
    $region2: #{tpu_custom_call.1} parent=1 // pred_check
      _
    $region3: #{tpu_custom_call.1} parent=1 // pred_check_branch
      %19 = sbr.rel (0) target = $region5
    $region4: #{tpu_custom_call.1} parent=1 // pred_region
      %s21 = ssub.s32 64, 64
      %22 = vsyncadd [#allocation4], %s21
      %s24 = sshll.u32 [#allocation3], 4
      %s25 = int_to_ptr.vmem [resolvable:$true] %s24
      %27 = dma.hbm_to_vmem [thread:$0]  %s0, 64, %s25, [#allocation4]
    $region5: #{tpu_custom_call.1} parent=1 // pred_fallthru
      _
    // Predicated region
    $region6: #{tpu_custom_call.1} parent=1 // pred_check
      _
    $region7: #{tpu_custom_call.1} parent=1 // pred_check_branch
      %29 = sbr.rel (0) target = $region9
    $region8: #{tpu_custom_call.1} parent=1 // pred_region
      %s31 = ssub.s32 1024, 1024
      %32 = vsyncadd [#allocation7], %s31
      %s33 = sshll.u32 [#allocation6], 4
      %s34 = int_to_ptr.vmem [resolvable:$true] %s33
      %39 = dma.hbm_to_vmem [thread:$0]  %s1, 1024, %s34, [#allocation7], 64, 64, 4
    $region9: #{tpu_custom_call.1} parent=1 // pred_fallthru
      _
    // Predicated region
    $region10: #{tpu_custom_call.1} parent=1 // pred_check
      _
    $region11: #{tpu_custom_call.1} parent=1 // pred_check_branch
      %41 = sbr.rel (0) target = $region13
    $region12: #{tpu_custom_call.1} parent=1 // pred_region
      _
    $region13: #{tpu_custom_call.1} parent=1 // pred_fallthru
      _
    // Predicated region
    $region14: #{tpu_custom_call.1} parent=1 // pred_check
      _
    $region15: #{tpu_custom_call.1} parent=1 // pred_check_branch
      %43 = sbr.rel (0) target = $region17
    $region16: #{tpu_custom_call.1} parent=1 // pred_region
      _
    $region17: #{tpu_custom_call.1} parent=1 // pred_fallthru
      _
    // Predicated region
    $region18: #{tpu_custom_call.1} parent=1 // pred_check
      _
    $region19: #{tpu_custom_call.1} parent=1 // pred_check_branch
      %45 = sbr.rel (0) target = $region21
    $region20: #{tpu_custom_call.1} parent=1 // pred_region
      _
    $region21: #{tpu_custom_call.1} parent=1 // pred_fallthru
      _
    // Predicated region
    $region22: #{tpu_custom_call.1} parent=1 // pred_check
      _
    $region23: #{tpu_custom_call.1} parent=1 // pred_check_branch
      %47 = sbr.rel (0) target = $region25
    $region24: #{tpu_custom_call.1} parent=1 // pred_region
      %s49 = ssub.s32 1024, 1024
      %50 = vsyncadd [#allocation7], %s49
      %s51 = sshll.u32 [#allocation8], 4
      %s52 = int_to_ptr.vmem [resolvable:$true] %s51
      %57 = dma.hbm_to_vmem [thread:$0]  %s5, 1024, %s52, [#allocation7], 64, 64, 4
    $region25: #{tpu_custom_call.1} parent=1 // pred_fallthru
      _
    // Predicated region
    $region26: #{tpu_custom_call.1} parent=1 // pred_check
      _
    $region27: #{tpu_custom_call.1} parent=1 // pred_check_branch
      %59 = sbr.rel (0) target = $region29
    $region28: #{tpu_custom_call.1} parent=1 // pred_region
      _
    $region29: #{tpu_custom_call.1} parent=1 // pred_fallthru
      _
    // Predicated region
    $region30: #{tpu_custom_call.1} parent=1 // pred_check
      _
    $region31: #{tpu_custom_call.1} parent=1 // pred_check_branch
      %61 = sbr.rel (0) target = $region33
    $region32: #{tpu_custom_call.1} parent=1 // pred_region
      %62 = dma.done [#allocation4], 64
    $region33: #{tpu_custom_call.1} parent=1 // pred_fallthru
      _
    // Predicated region
    $region34: #{tpu_custom_call.1} parent=1 // pred_check
      _
    $region35: #{tpu_custom_call.1} parent=1 // pred_check_branch
      %64 = sbr.rel (0) target = $region37
    $region36: #{tpu_custom_call.1} parent=1 // pred_region
      %65 = dma.done [#allocation7], 1024
    $region37: #{tpu_custom_call.1} parent=1 // pred_fallthru
      _
    // Predicated region
    $region38: #{tpu_custom_call.1} parent=1 // pred_check
      _
    $region39: #{tpu_custom_call.1} parent=1 // pred_check_branch
      %67 = sbr.rel (0) target = $region41
    $region40: #{tpu_custom_call.1} parent=1 // pred_region
      %68 = dma.done [#allocation7], 1024
    $region41: #{tpu_custom_call.1} parent=1 // pred_fallthru
      _
    %p70 = scmp.eq.s32.totalorder 0, 0
    // Predicated region
    $region42: #{tpu_custom_call.1} parent=1 // pred_check
      %p71 = pneg %p70
    $region43: #{tpu_custom_call.1} parent=1 // pred_check_branch
      %73 = sbr.rel (%p71) target = $region45
    $region44: #{tpu_custom_call.1} parent=1 // pred_region
      %v74 = vld [vmem:[#allocation3] sm:$0xf]
      %v75 = vld [vmem:[#allocation6] sm:$0xf]
      %v76 = vld [vmem:[#allocation6 + $0x4] sm:$0xf]
      %v77 = vld [vmem:[#allocation6 + $0x8] sm:$0xf]
      %v78 = vld [vmem:[#allocation6 + $0xc] sm:$0xf]
      %v79 = vld [vmem:[#allocation6 + $0x10] sm:$0xf]
      %v80 = vld [vmem:[#allocation6 + $0x14] sm:$0xf]
      %v81 = vld [vmem:[#allocation6 + $0x18] sm:$0xf]
      %v82 = vld [vmem:[#allocation6 + $0x1c] sm:$0xf]
      %v83 = vld [vmem:[#allocation6 + $0x20] sm:$0xf]
      %v84 = vld [vmem:[#allocation6 + $0x24] sm:$0xf]
      %v85 = vld [vmem:[#allocation6 + $0x28] sm:$0xf]
      %v86 = vld [vmem:[#allocation6 + $0x2c] sm:$0xf]
      %v87 = vld [vmem:[#allocation6 + $0x30] sm:$0xf]
      %v88 = vld [vmem:[#allocation6 + $0x34] sm:$0xf]
      %v89 = vld [vmem:[#allocation6 + $0x38] sm:$0xf]
      %v90 = vld [vmem:[#allocation6 + $0x3c] sm:$0xf]
      %v91 = vld [vmem:[%s2] sm:$0x1]
      %v93 = vlaneseq
      %v94 = vshrl.u32 %v93, 7
      %v95 = vsub.s32 0, %v94
      %v96 = vrot.slane %v91, %v95
      %v114 = vunpack.c.l.b16 %v75
      %v115 = vunpack.c.l.b16 %v76
      %v116 = vunpack.c.l.b16 %v77
      %v117 = vunpack.c.l.b16 %v78
      %v118 = vunpack.c.l.b16 %v79
      %v119 = vunpack.c.l.b16 %v80
      %v120 = vunpack.c.l.b16 %v81
      %v121 = vunpack.c.l.b16 %v82
      %v122 = vunpack.c.l.b16 %v83
      %v123 = vunpack.c.l.b16 %v84
      %v124 = vunpack.c.l.b16 %v85
      %v125 = vunpack.c.l.b16 %v86
      %v126 = vunpack.c.l.b16 %v87
      %v127 = vunpack.c.l.b16 %v88
      %v128 = vunpack.c.l.b16 %v89
      %v129 = vunpack.c.l.b16 %v90
      %v130 = vpack.c.b16 %v115, %v114
      %v131 = vpack.c.b16 %v117, %v116
      %v132 = vpack.c.b16 %v119, %v118
      %v133 = vpack.c.b16 %v121, %v120
      %v134 = vpack.c.b16 %v123, %v122
      %v135 = vpack.c.b16 %v125, %v124
      %v136 = vpack.c.b16 %v127, %v126
      %v137 = vpack.c.b16 %v129, %v128
      %146 = vmatprep.subr.bf16.mxu0 0
      %147 = vmatpush1.bf16.msra.mxu0 %v137
      %148 = vmatprep.subr.bf16.mxu0 0
      %149 = vmatpush1.bf16.msra.mxu0 %v136
      %150 = vmatprep.subr.bf16.mxu0 0
      %151 = vmatpush1.bf16.msra.mxu0 %v135
      %152 = vmatprep.subr.bf16.mxu0 0
      %153 = vmatpush1.bf16.msra.mxu0 %v134
      %154 = vmatprep.subr.bf16.mxu0 0
      %155 = vmatpush1.bf16.msra.mxu0 %v133
      %156 = vmatprep.subr.bf16.mxu0 0
      %157 = vmatpush1.bf16.msra.mxu0 %v132
      %158 = vmatprep.subr.bf16.mxu0 0
      %159 = vmatpush1.bf16.msra.mxu0 %v131
      %160 = vmatprep.subr.bf16.mxu0 0
      %161 = vmatpush1.bf16.msra.mxu0 %v130
      %162 = vmatprep.subr.bf16.mxu0 0
      %163 = vmatpush2.bf16.msra.mxu0 0
      %164 = vmatprep.subr.bf16.mxu0 0
      %165 = vmatpush2.bf16.msra.mxu0 0
      %166 = vmatprep.subr.bf16.mxu0 0
      %167 = vmatpush2.bf16.msra.mxu0 0
      %168 = vmatprep.subr.bf16.mxu0 0
      %169 = vmatpush2.bf16.msra.mxu0 0
      %170 = vmatprep.subr.bf16.mxu0 0
      %171 = vmatpush2.bf16.msra.mxu0 0
      %172 = vmatprep.subr.bf16.mxu0 0
      %173 = vmatpush2.bf16.msra.mxu0 0
      %174 = vmatprep.subr.bf16.mxu0 0
      %175 = vmatpush2.bf16.msra.mxu0 0
      %176 = vmatprep.subr.bf16.mxu0 0
      %177 = vmatpush2.bf16.msra.mxu0 0
      %178 = vmatprep.mubr.bf16.mxu0 0
      %179 = vmatmul.mubr.bf16.gmra.mxu0 %v74
      %v180 = vpop.f32.mrf.mxu0
      %v181 = vadd.f32 %v96, %v180
      %v182 = vpop.f32.mrf.mxu0
      %v183 = vpop.f32.mrf.mxu0
      %v184 = vpop.f32.mrf.mxu0
      %185 = vdwg.mxu0
      %186 = vst [vmem:[#allocation10] sm:$0xff] %v181
      %v187 = vlaneseq
      %v188 = vshrl.u32 %v187, 7
      %vm189 = vcmp.lt.s32.totalorder %v188, 6
      %v190 = vsel %vm189, 1, 0
      %v191 = vcvt.s32.f32 %v190
      %v192 = vmul.f32 %v181, %v191
      %v193 = vrot.slane %v192, 4
      %v194 = vadd.f32 %v192, %v193
      %v195 = vrot.slane %v194, 2
      %v196 = vadd.f32 %v194, %v195
      %v197 = vrot.slane %v196, 1
      %v198 = vadd.f32 %v196, %v197
      %v199 = vmul.f32 %v198, 0.16666667
      %v200 = vsub.f32 %v181, %v199
      %v201 = vmul.f32 %v200, %v191
      %v202 = vmul.f32 %v201, %v201
      %v203 = vrot.slane %v202, 4
      %v204 = vadd.f32 %v202, %v203
      %v205 = vrot.slane %v204, 2
      %v206 = vadd.f32 %v204, %v205
      %v207 = vrot.slane %v206, 1
      %v208 = vadd.f32 %v206, %v207
      %v209 = vmul.f32 %v208, 0.16666667
      %v210 = vld [vmem:[%s3] sm:$0x1]
      %v211 = vadd.f32 %v209, 1e-05
      %v212 = vrsqrt.pop %v211
      %v213 = vmul.f32 %v210, %v212
      %v214 = vld [vmem:[%s4] sm:$0x1]
      %v215 = vmul.f32 %v199, %v213
      %v216 = vsub.f32 %v214, %v215
      %v218 = vlaneseq
      %v219 = vshrl.u32 %v218, 7
      %v220 = vsub.s32 0, %v219
      %v221 = vrot.slane %v213, %v220
      %v223 = vmul.f32 %v181, %v221
      %v225 = vlaneseq
      %v226 = vshrl.u32 %v225, 7
      %v227 = vsub.s32 0, %v226
      %v228 = vrot.slane %v216, %v227
      %v230 = vadd.f32 %v223, %v228
      %v231 = vmax.f32 %v230, 0.0
      %v232 = vpack.c.bf16 %v231, %v231
      %233 = vst [vmem:[#allocation2] sm:$0xf] %v232
    $region45: #{tpu_custom_call.1} parent=1 // pred_fallthru
      _
    %v234 = vld [vmem:[#allocation2] sm:$0xf]
    %v235 = vld [vmem:[#allocation8] sm:$0xf]
    %v236 = vld [vmem:[#allocation8 + $0x4] sm:$0xf]
    %v237 = vld [vmem:[#allocation8 + $0x8] sm:$0xf]
    %v238 = vld [vmem:[#allocation8 + $0xc] sm:$0xf]
    %v239 = vld [vmem:[#allocation8 + $0x10] sm:$0xf]
    %v240 = vld [vmem:[#allocation8 + $0x14] sm:$0xf]
    %v241 = vld [vmem:[#allocation8 + $0x18] sm:$0xf]
    %v242 = vld [vmem:[#allocation8 + $0x1c] sm:$0xf]
    %v243 = vld [vmem:[#allocation8 + $0x20] sm:$0xf]
    %v244 = vld [vmem:[#allocation8 + $0x24] sm:$0xf]
    %v245 = vld [vmem:[#allocation8 + $0x28] sm:$0xf]
    %v246 = vld [vmem:[#allocation8 + $0x2c] sm:$0xf]
    %v247 = vld [vmem:[#allocation8 + $0x30] sm:$0xf]
    %v248 = vld [vmem:[#allocation8 + $0x34] sm:$0xf]
    %v249 = vld [vmem:[#allocation8 + $0x38] sm:$0xf]
    %v250 = vld [vmem:[#allocation8 + $0x3c] sm:$0xf]
    %v251 = vld [vmem:[%s6] sm:$0x1]
    %v253 = vlaneseq
    %v254 = vshrl.u32 %v253, 7
    %v255 = vsub.s32 0, %v254
    %v256 = vrot.slane %v251, %v255
    %v274 = vunpack.c.l.b16 %v235
    %v275 = vunpack.c.l.b16 %v236
    %v276 = vunpack.c.l.b16 %v237
    %v277 = vunpack.c.l.b16 %v238
    %v278 = vunpack.c.l.b16 %v239
    %v279 = vunpack.c.l.b16 %v240
    %v280 = vunpack.c.l.b16 %v241
    %v281 = vunpack.c.l.b16 %v242
    %v282 = vunpack.c.l.b16 %v243
    %v283 = vunpack.c.l.b16 %v244
    %v284 = vunpack.c.l.b16 %v245
    %v285 = vunpack.c.l.b16 %v246
    %v286 = vunpack.c.l.b16 %v247
    %v287 = vunpack.c.l.b16 %v248
    %v288 = vunpack.c.l.b16 %v249
    %v289 = vunpack.c.l.b16 %v250
    %v290 = vpack.c.b16 %v275, %v274
    %v291 = vpack.c.b16 %v277, %v276
    %v292 = vpack.c.b16 %v279, %v278
    %v293 = vpack.c.b16 %v281, %v280
    %v294 = vpack.c.b16 %v283, %v282
    %v295 = vpack.c.b16 %v285, %v284
    %v296 = vpack.c.b16 %v287, %v286
    %v297 = vpack.c.b16 %v289, %v288
    %306 = vmatprep.subr.bf16.mxu0 0
    %307 = vmatpush1.bf16.msra.mxu0 %v297
    %308 = vmatprep.subr.bf16.mxu0 0
    %309 = vmatpush1.bf16.msra.mxu0 %v296
    %310 = vmatprep.subr.bf16.mxu0 0
    %311 = vmatpush1.bf16.msra.mxu0 %v295
    %312 = vmatprep.subr.bf16.mxu0 0
    %313 = vmatpush1.bf16.msra.mxu0 %v294
    %314 = vmatprep.subr.bf16.mxu0 0
    %315 = vmatpush1.bf16.msra.mxu0 %v293
    %316 = vmatprep.subr.bf16.mxu0 0
    %317 = vmatpush1.bf16.msra.mxu0 %v292
    %318 = vmatprep.subr.bf16.mxu0 0
    %319 = vmatpush1.bf16.msra.mxu0 %v291
    %320 = vmatprep.subr.bf16.mxu0 0
    %321 = vmatpush1.bf16.msra.mxu0 %v290
    %322 = vmatprep.subr.bf16.mxu0 0
    %323 = vmatpush2.bf16.msra.mxu0 0
    %324 = vmatprep.subr.bf16.mxu0 0
    %325 = vmatpush2.bf16.msra.mxu0 0
    %326 = vmatprep.subr.bf16.mxu0 0
    %327 = vmatpush2.bf16.msra.mxu0 0
    %328 = vmatprep.subr.bf16.mxu0 0
    %329 = vmatpush2.bf16.msra.mxu0 0
    %330 = vmatprep.subr.bf16.mxu0 0
    %331 = vmatpush2.bf16.msra.mxu0 0
    %332 = vmatprep.subr.bf16.mxu0 0
    %333 = vmatpush2.bf16.msra.mxu0 0
    %334 = vmatprep.subr.bf16.mxu0 0
    %335 = vmatpush2.bf16.msra.mxu0 0
    %336 = vmatprep.subr.bf16.mxu0 0
    %337 = vmatpush2.bf16.msra.mxu0 0
    %338 = vmatprep.mubr.bf16.mxu0 0
    %339 = vmatmul.mubr.bf16.gmra.mxu0 %v234
    %v340 = vpop.f32.mrf.mxu0
    %v341 = vadd.f32 %v256, %v340
    %v342 = vpop.f32.mrf.mxu0
    %v343 = vpop.f32.mrf.mxu0
    %v344 = vpop.f32.mrf.mxu0
    %345 = vdwg.mxu0
    %346 = vst [vmem:[#allocation9] sm:$0xff] %v341
    // Predicated region
    $region46: #{tpu_custom_call.1} parent=1 // pred_check
      _
    $region47: #{tpu_custom_call.1} parent=1 // pred_check_branch
      %348 = sbr.rel (0) target = $region49
    $region48: #{tpu_custom_call.1} parent=1 // pred_region
      %s350 = ssub.s32 128, 128
      %351 = vsyncadd [#allocation5], %s350
      %s353 = sshll.u32 [#allocation9], 4
      %s354 = int_to_ptr.vmem [resolvable:$true] %s353
      %356 = dma.vmem_to_hbm [thread:$0]  %s354, 128, %s7, [#allocation5]
    $region49: #{tpu_custom_call.1} parent=1 // pred_fallthru
      _
    // Predicated region
    $region50: #{tpu_custom_call.1} parent=1 // pred_check
      _
    $region51: #{tpu_custom_call.1} parent=1 // pred_check_branch
      %358 = sbr.rel (0) target = $region53
    $region52: #{tpu_custom_call.1} parent=1 // pred_region
      %s360 = ssub.s32 128, 128
      %361 = vsyncadd [#allocation11], %s360
      %s363 = sshll.u32 [#allocation10], 4
      %s364 = int_to_ptr.vmem [resolvable:$true] %s363
      %366 = dma.vmem_to_hbm [thread:$0]  %s364, 128, %s8, [#allocation11]
    $region53: #{tpu_custom_call.1} parent=1 // pred_fallthru
      _
    // Predicated region
    $region54: #{tpu_custom_call.1} parent=1 // pred_check
      _
    $region55: #{tpu_custom_call.1} parent=1 // pred_check_branch
      %368 = sbr.rel (0) target = $region57
    $region56: #{tpu_custom_call.1} parent=1 // pred_region
      %369 = dma.done [#allocation5], 128
    $region57: #{tpu_custom_call.1} parent=1 // pred_fallthru
      _
    // Predicated region
    $region58: #{tpu_custom_call.1} parent=1 // pred_check
      _
    $region59: #{tpu_custom_call.1} parent=1 // pred_check_branch
      %371 = sbr.rel (0) target = $region61
    $region60: #{tpu_custom_call.1} parent=1 // pred_region
      %372 = dma.done [#allocation11], 128
    $region61: #{tpu_custom_call.1} parent=1 // pred_fallthru
      _
    %373 = vsyncpa [#allocation4], 1
    %374 = vsyncpa [#allocation7], 1
    %375 = vsyncpa [#allocation5], 1
    %376 = vsyncpa [#allocation11], 1

</llo_original>
